<compile_context>
chip_gen: v5e
topology: v5e:2x2
jax: 0.10.0
libtpu: 0.0.40
codegen_flags: <defaults>
</compile_context>

<pallas_src>
import functools

import numpy as np
import jax
import jax.numpy as jnp
from jax import lax
from jax.experimental import pallas as pl
from jax.experimental.pallas import tpu as pltpu


def _roi_pool_kernel(batch_ref, w0_ref, hs_ref, he_ref, ws_ref, we_ref,
                     feat_ref, out_ref, *, ph_n, pw_n, w_win, compute_dtype):
    # grid = (channel_tiles, roi_split, rois_per_split)
    r = pl.program_id(1) * pl.num_programs(2) + pl.program_id(2)
    _, _, _, Ct = feat_ref.shape

    neg = jnp.array(-jnp.inf, dtype=compute_dtype)
    zero = jnp.zeros((1, Ct), dtype=compute_dtype)

    # 8-aligned start of this ROI's w-window inside the (padded) feature map.
    w0 = pl.multiple_of(w0_ref[r], 8)

    # Hoisted per-pw masks: depend only on (r, pw), reused for every ph.
    w_iota = lax.broadcasted_iota(jnp.int32, (w_win, 1), 0) + w0
    w_masks, w_empty = [], []
    for pw in range(pw_n):
        ws = ws_ref[r * pw_n + pw]
        we = we_ref[r * pw_n + pw]
        w_masks.append((w_iota >= ws) & (w_iota < we))
        w_empty.append(we <= ws)

    rows = []
    for ph in range(ph_n):
        hs = hs_ref[r * ph_n + ph]
        he = he_ref[r * ph_n + ph]
        h_empty = he <= hs

        # Stage 1: reduce the dynamic h-range once -> (w_win, Ct) slab.
        def h_body(h, acc):
            row = feat_ref[0, h, pl.ds(w0, w_win), :].astype(compute_dtype)
            return jnp.maximum(acc, row)

        slab = lax.fori_loop(
            hs, he, h_body,
            jnp.full((w_win, Ct), neg, dtype=compute_dtype))

        # Stage 2: per pw, masked max over the (small) sublane axis; the lane
        # (channel) axis stays dense.
        for pw in range(pw_n):
            m = jnp.max(jnp.where(w_masks[pw], slab, neg),
                        axis=0, keepdims=True)                     # (1, Ct)
            is_empty = jnp.logical_or(h_empty, w_empty[pw])
            rows.append(jnp.where(is_empty, zero, m))

    # Single lane-dense (PH*PW, Ct) store per grid step (mostly unmasked vst).
    out_ref[0] = jnp.concatenate(rows, axis=0).astype(out_ref.dtype)


def roi_pool(features, rois, pooled_height, pooled_width, spatial_scale):
    """RoIPool forward. features: (B, C, H, W); rois: (R, 5) = [b, x1, y1, x2, y2]."""
    B, C, H, W = map(int, features.shape)
    R = int(rois.shape[0])
    PH, PW = int(pooled_height), int(pooled_width)

    # ---------------- device / generation awareness -----------------------
    try:
        kind = jax.devices()[0].device_kind.lower()
    except Exception:
        kind = ""
    is_v5 = "v5" in kind
    is_v7 = "v7" in kind
    try:
        vmem_cap = int(getattr(pltpu.get_tpu_info(), "vmem_capacity_bytes",
                               64 << 20))
    except Exception:
        vmem_cap = 64 << 20

    # Max is exact in bf16 (compare-only), so keep bf16 through the VPU on
    # chips with bf16 VALUs; on v5e upcast per-row inside the kernel instead.
    if features.dtype == jnp.bfloat16 and not is_v5:
        compute_dtype = jnp.bfloat16
    else:
        compute_dtype = jnp.float32
    out_dtype = features.dtype

    # ---------- host-side scalar tables (small; static window width) ------
    rois_np = np.asarray(jax.device_get(rois), dtype=np.float64)
    order = np.argsort(rois_np[:, 0], kind="stable").astype(np.int32)
    inv_order = np.argsort(order, kind="stable").astype(np.int32)
    rois_s = rois_np[order]

    batch_inds = rois_s[:, 0].astype(np.int32)
    coords = np.round(rois_s[:, 1:] * float(spatial_scale)).astype(np.int64)
    x1, y1, x2, y2 = coords[:, 0], coords[:, 1], coords[:, 2], coords[:, 3]
    roi_w = np.maximum(x2 - x1 + 1, 1).astype(np.float64)
    roi_h = np.maximum(y2 - y1 + 1, 1).astype(np.float64)
    bin_w = roi_w / float(PW)
    bin_h = roi_h / float(PH)

    ph_i = np.arange(PH, dtype=np.float64)
    pw_i = np.arange(PW, dtype=np.float64)
    hs = np.clip(np.floor(ph_i[None] * bin_h[:, None]).astype(np.int64)
                 + y1[:, None], 0, H)
    he = np.clip(np.ceil((ph_i[None] + 1.0) * bin_h[:, None]).astype(np.int64)
                 + y1[:, None], 0, H)
    ws = np.clip(np.floor(pw_i[None] * bin_w[:, None]).astype(np.int64)
                 + x1[:, None], 0, W)
    we = np.clip(np.ceil((pw_i[None] + 1.0) * bin_w[:, None]).astype(np.int64)
                 + x1[:, None], 0, W)

    # ---- ROI w-window: 8-aligned start + static padded width -------------
    W_pad = ((W + 7) // 8) * 8
    w0 = (ws[:, 0] // 8) * 8                         # per-ROI, multiples of 8
    ext = np.maximum(we[:, PW - 1] - w0, 1)
    Wroi = int(ext.max()) if R > 0 else 1
    Wroi = min(((Wroi + 7) // 8) * 8, W_pad)
    w0 = np.maximum(np.minimum(w0, W_pad - Wroi), 0)  # stays 8-aligned & in-bounds

    # ---- v7x: split batch-sorted ROIs into contiguous halves (1 per TC) --
    n_split = 2 if (is_v7 and R >= 2) else 1
    R_half = -(-R // n_split)
    R_pad = n_split * R_half
    pad = R_pad - R
    if pad:
        rep = lambda a: np.concatenate([a, np.repeat(a[-1:], pad, axis=0)], 0)
        batch_inds, w0, hs, he, ws, we = map(rep, (batch_inds, w0, hs, he, ws, we))

    batch_t = jnp.asarray(batch_inds, jnp.int32)
    w0_t = jnp.asarray(w0, jnp.int32)
    hs_t = jnp.asarray(hs.reshape(-1), jnp.int32)
    he_t = jnp.asarray(he.reshape(-1), jnp.int32)
    ws_t = jnp.asarray(ws.reshape(-1), jnp.int32)
    we_t = jnp.asarray(we.reshape(-1), jnp.int32)

    # Channels-last; pad W to a multiple of 8 so the aligned window never
    # leaves the block (padded columns are always masked out).
    feats_nhwc = jnp.transpose(features, (0, 2, 3, 1))          # (B, H, W, C)
    if W_pad != W:
        feats_nhwc = jnp.pad(feats_nhwc,
                             ((0, 0), (0, 0), (0, W_pad - W), (0, 0)))

    # ---- channel tile: bounded by VMEM footprint AND vreg pressure -------
    feat_itemsize = jnp.dtype(features.dtype).itemsize
    out_itemsize = jnp.dtype(out_dtype).itemsize
    compute_itemsize = jnp.dtype(compute_dtype).itemsize

    has_buffered = hasattr(pl, "Buffered")
    n_feat_bufs = 3 if has_buffered else 2

    if C % 128 == 0 and C > 128:
        cands = sorted((t for t in range(128, C + 1, 128) if C % t == 0),
                       reverse=True)
    else:
        cands = [C]

    vreg_budget = 96 * 1024            # ~24 vregs for the (Wroi, tc) loop carry
    vmem_budget = (vmem_cap * 3) // 4

    def footprint(t):
        return (n_feat_bufs * H * W_pad * t * feat_itemsize
                + 2 * PH * PW * t * out_itemsize + (2 << 20))

    tc = cands[-1]
    for t in cands:
        if (Wroi * t * compute_itemsize <= vreg_budget
                and footprint(t) <= vmem_budget):
            tc = t
            break
    # TODO(synk): if footprint(tc) still exceeds vmem_budget (huge H*W with
    # C % 128 != 0), tile H in the grid with a cross-tile max accumulate or
    # DMA only rows [min(hs), max(he)) via memory_space=pl.ANY + async copy.
    n_ct = C // tc

    needed = footprint(tc)
    vmem_limit = None
    if needed > (24 << 20):
        vmem_limit = int(min(needed + (4 << 20), vmem_cap))

    # ---------------------------- pallas call ------------------------------
    def feat_index_map(c, s, r, batch_ref, *_):
        return (batch_ref[s * R_half + r], 0, 0, c)

    def out_index_map(c, s, r, *_):
        return (s * R_half + r, 0, c)

    feat_block = (1, H, W_pad, tc)
    out_spec = pl.BlockSpec((1, PH * PW, tc), out_index_map)

    kernel = functools.partial(_roi_pool_kernel, ph_n=PH, pw_n=PW,
                               w_win=Wroi, compute_dtype=compute_dtype)

    def run(feature_spec):
        gs = pltpu.PrefetchScalarGridSpec(
            num_scalar_prefetch=6,
            grid=(n_ct, n_split, R_half),
            in_specs=[feature_spec],
            out_specs=out_spec)
        fn = pl.pallas_call(
            kernel,
            out_shape=jax.ShapeDtypeStruct((R_pad, PH * PW, C), out_dtype),
            grid_spec=gs,
            compiler_params=pltpu.CompilerParams(
                dimension_semantics=("parallel", "parallel", "arbitrary"),
                vmem_limit_bytes=vmem_limit))
        return fn(batch_t, w0_t, hs_t, he_t, ws_t, we_t, feats_nhwc)

    base_spec = pl.BlockSpec(feat_block, feat_index_map)
    if has_buffered:
        try:
            out = run(pl.BlockSpec(feat_block, feat_index_map,
                                   pipeline_mode=pl.Buffered(3)))
        except Exception:
            out = run(base_spec)      # fall back to default double-buffering
    else:
        out = run(base_spec)

    # Drop padding, undo the ROI sort, back to PyTorch (R, C, PH, PW) layout.
    out = out[:R][jnp.asarray(inv_order)]
    out = out.reshape(R, PH, PW, C)
    return jnp.transpose(out, (0, 3, 1, 2))


def roi_pool_reference(features, rois, PH, PW, scale):
    """Direct numpy transcription of the PyTorch forward (for verification)."""
    features = np.asarray(features)
    rois = np.asarray(rois, dtype=np.float64)
    B, C, H, W = features.shape
    R = rois.shape[0]
    out = np.zeros((R, C, PH, PW), dtype=np.float32)
    for ri in range(R):
        roi = rois[ri]
        b = int(roi[0])
        x1, y1, x2, y2 = np.round(roi[1:] * float(scale)).astype(int)
        roi_w = max(x2 - x1 + 1, 1)
        roi_h = max(y2 - y1 + 1, 1)
        bw = float(roi_w) / float(PW)
        bh = float(roi_h) / float(PH)
        for ph in range(PH):
            hstart = min(H, max(0, int(np.floor(ph * bh)) + y1))
            hend = min(H, max(0, int(np.ceil((ph + 1) * bh)) + y1))
            for pw_ in range(PW):
                wstart = min(W, max(0, int(np.floor(pw_ * bw)) + x1))
                wend = min(W, max(0, int(np.ceil((pw_ + 1) * bw)) + x1))
                if hend <= hstart or wend <= wstart:
                    out[ri, :, ph, pw_] = 0.0
                else:
                    out[ri, :, ph, pw_] = features[b, :, hstart:hend,
                                                   wstart:wend].max(axis=(1, 2))
    return out


if __name__ == "__main__":
    B, C, H, W = 2, 4, 16, 16
    PH, PW = 4, 4
    spatial_scale = 0.25
    R = 6

    key = jax.random.PRNGKey(0)
    k1, k2, k3, k4 = jax.random.split(key, 4)

    features = jax.random.normal(k1, (B, C, H, W), dtype=jnp.float32)

    # rois: [batch_idx, x1, y1, x2, y2] in image coordinates (1/scale = 4x).
    batch_col = jax.random.randint(k2, (R,), 0, B).astype(jnp.float32)
    xy1 = jax.random.uniform(k3, (R, 2), minval=0.0, maxval=40.0,
                             dtype=jnp.float32)
    wh = jax.random.uniform(k4, (R, 2), minval=4.0, maxval=20.0,
                            dtype=jnp.float32)
    xy2 = xy1 + wh
    rois = jnp.concatenate(
        [batch_col[:, None], xy1[:, 0:1], xy1[:, 1:2], xy2[:, 0:1], xy2[:, 1:2]],
        axis=1)

    out = roi_pool(features, rois, PH, PW, spatial_scale)
    out = jax.block_until_ready(out)

    ref = roi_pool_reference(features, rois, PH, PW, spatial_scale)
    np.testing.assert_allclose(np.asarray(out, dtype=np.float32), ref,
                               rtol=1e-6, atol=1e-6)

    print("KERNEL_OK")
</pallas_src>

<mosaic_0001>
module attributes {stable_mosaic.version = 11 : i64} {
  func.func @_roi_pool_kernel(%arg0: i32, %arg1: i32, %arg2: i32, %arg3: memref<6xi32, #tpu.memory_space<smem>>, %arg4: memref<6xi32, #tpu.memory_space<smem>>, %arg5: memref<24xi32, #tpu.memory_space<smem>>, %arg6: memref<24xi32, #tpu.memory_space<smem>>, %arg7: memref<24xi32, #tpu.memory_space<smem>>, %arg8: memref<24xi32, #tpu.memory_space<smem>>, %arg9: memref<1x16x16x4xf32, #tpu.memory_space<vmem>>, %arg10: memref<1x16x4xf32, #tpu.memory_space<vmem>>) attributes {dimension_semantics = [#tpu.dimension_semantics<parallel>, #tpu.dimension_semantics<parallel>, #tpu.dimension_semantics<arbitrary>], iteration_bounds = array<i64: 1, 1, 6>, scalar_prefetch = 6 : i64, scratch_operands = 0 : i64, tpu.core_type = #tpu.core_type<tc>, window_params = [{transform_indices = @transform_0, window_bounds = array<i64: 1, 16, 16, 4>}, {transform_indices = @transform_1, window_bounds = array<i64: 1, 16, 4>}]} {
    %c6_i32 = arith.constant 6 : i32
    %0 = arith.muli %arg1, %c6_i32 : i32
    %1 = arith.addi %0, %arg2 : i32
    %cst = arith.constant 0.000000e+00 : f32
    %2 = vector.broadcast %cst : f32 to vector<1x4xf32>
    %3 = arith.index_cast %1 : i32 to index
    %4 = memref.load %arg4[%3] : memref<6xi32, #tpu.memory_space<smem>>
    %5 = tpu.assume_multiple %4, 8 : i32
    %6 = tpu.iota {dimensions = array<i32: 0>} : vector<16x1xi32>
    %7 = vector.broadcast %5 : i32 to vector<16x1xi32>
    %8 = arith.addi %6, %7 : vector<16x1xi32>
    %c4_i32 = arith.constant 4 : i32
    %9 = arith.muli %1, %c4_i32 : i32
    %c0_i32 = arith.constant 0 : i32
    %10 = arith.addi %9, %c0_i32 : i32
    %11 = arith.index_cast %10 : i32 to index
    %12 = memref.load %arg7[%11] : memref<24xi32, #tpu.memory_space<smem>>
    %c4_i32_0 = arith.constant 4 : i32
    %13 = arith.muli %1, %c4_i32_0 : i32
    %c0_i32_1 = arith.constant 0 : i32
    %14 = arith.addi %13, %c0_i32_1 : i32
    %15 = arith.index_cast %14 : i32 to index
    %16 = memref.load %arg8[%15] : memref<24xi32, #tpu.memory_space<smem>>
    %17 = vector.broadcast %12 : i32 to vector<16x1xi32>
    %18 = arith.cmpi sge, %8, %17 : vector<16x1xi32>
    %19 = vector.broadcast %16 : i32 to vector<16x1xi32>
    %20 = arith.cmpi slt, %8, %19 : vector<16x1xi32>
    %21 = arith.andi %18, %20 : vector<16x1xi1>
    %22 = arith.cmpi sle, %16, %12 : i32
    %c4_i32_2 = arith.constant 4 : i32
    %23 = arith.muli %1, %c4_i32_2 : i32
    %c1_i32 = arith.constant 1 : i32
    %24 = arith.addi %23, %c1_i32 : i32
    %25 = arith.index_cast %24 : i32 to index
    %26 = memref.load %arg7[%25] : memref<24xi32, #tpu.memory_space<smem>>
    %c4_i32_3 = arith.constant 4 : i32
    %27 = arith.muli %1, %c4_i32_3 : i32
    %c1_i32_4 = arith.constant 1 : i32
    %28 = arith.addi %27, %c1_i32_4 : i32
    %29 = arith.index_cast %28 : i32 to index
    %30 = memref.load %arg8[%29] : memref<24xi32, #tpu.memory_space<smem>>
    %31 = vector.broadcast %26 : i32 to vector<16x1xi32>
    %32 = arith.cmpi sge, %8, %31 : vector<16x1xi32>
    %33 = vector.broadcast %30 : i32 to vector<16x1xi32>
    %34 = arith.cmpi slt, %8, %33 : vector<16x1xi32>
    %35 = arith.andi %32, %34 : vector<16x1xi1>
    %36 = arith.cmpi sle, %30, %26 : i32
    %c4_i32_5 = arith.constant 4 : i32
    %37 = arith.muli %1, %c4_i32_5 : i32
    %c2_i32 = arith.constant 2 : i32
    %38 = arith.addi %37, %c2_i32 : i32
    %39 = arith.index_cast %38 : i32 to index
    %40 = memref.load %arg7[%39] : memref<24xi32, #tpu.memory_space<smem>>
    %c4_i32_6 = arith.constant 4 : i32
    %41 = arith.muli %1, %c4_i32_6 : i32
    %c2_i32_7 = arith.constant 2 : i32
    %42 = arith.addi %41, %c2_i32_7 : i32
    %43 = arith.index_cast %42 : i32 to index
    %44 = memref.load %arg8[%43] : memref<24xi32, #tpu.memory_space<smem>>
    %45 = vector.broadcast %40 : i32 to vector<16x1xi32>
    %46 = arith.cmpi sge, %8, %45 : vector<16x1xi32>
    %47 = vector.broadcast %44 : i32 to vector<16x1xi32>
    %48 = arith.cmpi slt, %8, %47 : vector<16x1xi32>
    %49 = arith.andi %46, %48 : vector<16x1xi1>
    %50 = arith.cmpi sle, %44, %40 : i32
    %c4_i32_8 = arith.constant 4 : i32
    %51 = arith.muli %1, %c4_i32_8 : i32
    %c3_i32 = arith.constant 3 : i32
    %52 = arith.addi %51, %c3_i32 : i32
    %53 = arith.index_cast %52 : i32 to index
    %54 = memref.load %arg7[%53] : memref<24xi32, #tpu.memory_space<smem>>
    %c4_i32_9 = arith.constant 4 : i32
    %55 = arith.muli %1, %c4_i32_9 : i32
    %c3_i32_10 = arith.constant 3 : i32
    %56 = arith.addi %55, %c3_i32_10 : i32
    %57 = arith.index_cast %56 : i32 to index
    %58 = memref.load %arg8[%57] : memref<24xi32, #tpu.memory_space<smem>>
    %59 = vector.broadcast %54 : i32 to vector<16x1xi32>
    %60 = arith.cmpi sge, %8, %59 : vector<16x1xi32>
    %61 = vector.broadcast %58 : i32 to vector<16x1xi32>
    %62 = arith.cmpi slt, %8, %61 : vector<16x1xi32>
    %63 = arith.andi %60, %62 : vector<16x1xi1>
    %64 = arith.cmpi sle, %58, %54 : i32
    %c4_i32_11 = arith.constant 4 : i32
    %65 = arith.muli %1, %c4_i32_11 : i32
    %c0_i32_12 = arith.constant 0 : i32
    %66 = arith.addi %65, %c0_i32_12 : i32
    %67 = arith.index_cast %66 : i32 to index
    %68 = memref.load %arg5[%67] : memref<24xi32, #tpu.memory_space<smem>>
    %c4_i32_13 = arith.constant 4 : i32
    %69 = arith.muli %1, %c4_i32_13 : i32
    %c0_i32_14 = arith.constant 0 : i32
    %70 = arith.addi %69, %c0_i32_14 : i32
    %71 = arith.index_cast %70 : i32 to index
    %72 = memref.load %arg6[%71] : memref<24xi32, #tpu.memory_space<smem>>
    %73 = arith.cmpi sle, %72, %68 : i32
    %cst_15 = arith.constant 0xFF800000 : f32
    %74 = vector.broadcast %cst_15 : f32 to vector<16x4xf32>
    %75 = arith.subi %72, %68 : i32
    %76 = arith.addi %68, %75 : i32
    %c1_i32_16 = arith.constant 1 : i32
    %77 = scf.for %arg11 = %68 to %76 step %c1_i32_16 iter_args(%arg12 = %74) -> (vector<16x4xf32>)  : i32 {
      %c0_69 = arith.constant 0 : index
      %249 = arith.index_cast %arg11 : i32 to index
      %250 = arith.index_cast %5 : i32 to index
      %c0_70 = arith.constant 0 : index
      %251 = vector.load %arg9[%c0_69, %249, %250, %c0_70] : memref<1x16x16x4xf32, #tpu.memory_space<vmem>>, vector<1x1x16x4xf32>
      %252 = vector.shape_cast %251 : vector<1x1x16x4xf32> to vector<16x4xf32>
      %253 = arith.maximumf %arg12, %252 : vector<16x4xf32>
      scf.yield %253 : vector<16x4xf32>
    }
    %cst_17 = arith.constant 0xFF800000 : f32
    %78 = vector.shape_cast %21 : vector<16x1xi1> to vector<16x1xi1>
    %79 = vector.broadcast %78 : vector<16x1xi1> to vector<16x4xi1>
    %80 = vector.broadcast %cst_17 : f32 to vector<16x4xf32>
    %81 = arith.select %79, %77, %80 : vector<16x4xi1>, vector<16x4xf32>
    %cst_18 = arith.constant dense<0xFF800000> : vector<4xf32>
    %82 = vector.multi_reduction <maximumf>, %81, %cst_18 [0] : vector<16x4xf32> to vector<4xf32>
    %83 = vector.shape_cast %82 : vector<4xf32> to vector<1x4xf32>
    %84 = arith.ori %73, %22 : i1
    %85 = arith.select %84, %2, %83 : vector<1x4xf32>
    %cst_19 = arith.constant 0xFF800000 : f32
    %86 = vector.shape_cast %35 : vector<16x1xi1> to vector<16x1xi1>
    %87 = vector.broadcast %86 : vector<16x1xi1> to vector<16x4xi1>
    %88 = vector.broadcast %cst_19 : f32 to vector<16x4xf32>
    %89 = arith.select %87, %77, %88 : vector<16x4xi1>, vector<16x4xf32>
    %cst_20 = arith.constant dense<0xFF800000> : vector<4xf32>
    %90 = vector.multi_reduction <maximumf>, %89, %cst_20 [0] : vector<16x4xf32> to vector<4xf32>
    %91 = vector.shape_cast %90 : vector<4xf32> to vector<1x4xf32>
    %92 = arith.ori %73, %36 : i1
    %93 = arith.select %92, %2, %91 : vector<1x4xf32>
    %cst_21 = arith.constant 0xFF800000 : f32
    %94 = vector.shape_cast %49 : vector<16x1xi1> to vector<16x1xi1>
    %95 = vector.broadcast %94 : vector<16x1xi1> to vector<16x4xi1>
    %96 = vector.broadcast %cst_21 : f32 to vector<16x4xf32>
    %97 = arith.select %95, %77, %96 : vector<16x4xi1>, vector<16x4xf32>
    %cst_22 = arith.constant dense<0xFF800000> : vector<4xf32>
    %98 = vector.multi_reduction <maximumf>, %97, %cst_22 [0] : vector<16x4xf32> to vector<4xf32>
    %99 = vector.shape_cast %98 : vector<4xf32> to vector<1x4xf32>
    %100 = arith.ori %73, %50 : i1
    %101 = arith.select %100, %2, %99 : vector<1x4xf32>
    %cst_23 = arith.constant 0xFF800000 : f32
    %102 = vector.shape_cast %63 : vector<16x1xi1> to vector<16x1xi1>
    %103 = vector.broadcast %102 : vector<16x1xi1> to vector<16x4xi1>
    %104 = vector.broadcast %cst_23 : f32 to vector<16x4xf32>
    %105 = arith.select %103, %77, %104 : vector<16x4xi1>, vector<16x4xf32>
    %cst_24 = arith.constant dense<0xFF800000> : vector<4xf32>
    %106 = vector.multi_reduction <maximumf>, %105, %cst_24 [0] : vector<16x4xf32> to vector<4xf32>
    %107 = vector.shape_cast %106 : vector<4xf32> to vector<1x4xf32>
    %108 = arith.ori %73, %64 : i1
    %109 = arith.select %108, %2, %107 : vector<1x4xf32>
    %c4_i32_25 = arith.constant 4 : i32
    %110 = arith.muli %1, %c4_i32_25 : i32
    %c1_i32_26 = arith.constant 1 : i32
    %111 = arith.addi %110, %c1_i32_26 : i32
    %112 = arith.index_cast %111 : i32 to index
    %113 = memref.load %arg5[%112] : memref<24xi32, #tpu.memory_space<smem>>
    %c4_i32_27 = arith.constant 4 : i32
    %114 = arith.muli %1, %c4_i32_27 : i32
    %c1_i32_28 = arith.constant 1 : i32
    %115 = arith.addi %114, %c1_i32_28 : i32
    %116 = arith.index_cast %115 : i32 to index
    %117 = memref.load %arg6[%116] : memref<24xi32, #tpu.memory_space<smem>>
    %118 = arith.cmpi sle, %117, %113 : i32
    %cst_29 = arith.constant 0xFF800000 : f32
    %119 = vector.broadcast %cst_29 : f32 to vector<16x4xf32>
    %120 = arith.subi %117, %113 : i32
    %121 = arith.addi %113, %120 : i32
    %c1_i32_30 = arith.constant 1 : i32
    %122 = scf.for %arg11 = %113 to %121 step %c1_i32_30 iter_args(%arg12 = %119) -> (vector<16x4xf32>)  : i32 {
      %c0_69 = arith.constant 0 : index
      %249 = arith.index_cast %arg11 : i32 to index
      %250 = arith.index_cast %5 : i32 to index
      %c0_70 = arith.constant 0 : index
      %251 = vector.load %arg9[%c0_69, %249, %250, %c0_70] : memref<1x16x16x4xf32, #tpu.memory_space<vmem>>, vector<1x1x16x4xf32>
      %252 = vector.shape_cast %251 : vector<1x1x16x4xf32> to vector<16x4xf32>
      %253 = arith.maximumf %arg12, %252 : vector<16x4xf32>
      scf.yield %253 : vector<16x4xf32>
    }
    %cst_31 = arith.constant 0xFF800000 : f32
    %123 = vector.shape_cast %21 : vector<16x1xi1> to vector<16x1xi1>
    %124 = vector.broadcast %123 : vector<16x1xi1> to vector<16x4xi1>
    %125 = vector.broadcast %cst_31 : f32 to vector<16x4xf32>
    %126 = arith.select %124, %122, %125 : vector<16x4xi1>, vector<16x4xf32>
    %cst_32 = arith.constant dense<0xFF800000> : vector<4xf32>
    %127 = vector.multi_reduction <maximumf>, %126, %cst_32 [0] : vector<16x4xf32> to vector<4xf32>
    %128 = vector.shape_cast %127 : vector<4xf32> to vector<1x4xf32>
    %129 = arith.ori %118, %22 : i1
    %130 = arith.select %129, %2, %128 : vector<1x4xf32>
    %cst_33 = arith.constant 0xFF800000 : f32
    %131 = vector.shape_cast %35 : vector<16x1xi1> to vector<16x1xi1>
    %132 = vector.broadcast %131 : vector<16x1xi1> to vector<16x4xi1>
    %133 = vector.broadcast %cst_33 : f32 to vector<16x4xf32>
    %134 = arith.select %132, %122, %133 : vector<16x4xi1>, vector<16x4xf32>
    %cst_34 = arith.constant dense<0xFF800000> : vector<4xf32>
    %135 = vector.multi_reduction <maximumf>, %134, %cst_34 [0] : vector<16x4xf32> to vector<4xf32>
    %136 = vector.shape_cast %135 : vector<4xf32> to vector<1x4xf32>
    %137 = arith.ori %118, %36 : i1
    %138 = arith.select %137, %2, %136 : vector<1x4xf32>
    %cst_35 = arith.constant 0xFF800000 : f32
    %139 = vector.shape_cast %49 : vector<16x1xi1> to vector<16x1xi1>
    %140 = vector.broadcast %139 : vector<16x1xi1> to vector<16x4xi1>
    %141 = vector.broadcast %cst_35 : f32 to vector<16x4xf32>
    %142 = arith.select %140, %122, %141 : vector<16x4xi1>, vector<16x4xf32>
    %cst_36 = arith.constant dense<0xFF800000> : vector<4xf32>
    %143 = vector.multi_reduction <maximumf>, %142, %cst_36 [0] : vector<16x4xf32> to vector<4xf32>
    %144 = vector.shape_cast %143 : vector<4xf32> to vector<1x4xf32>
    %145 = arith.ori %118, %50 : i1
    %146 = arith.select %145, %2, %144 : vector<1x4xf32>
    %cst_37 = arith.constant 0xFF800000 : f32
    %147 = vector.shape_cast %63 : vector<16x1xi1> to vector<16x1xi1>
    %148 = vector.broadcast %147 : vector<16x1xi1> to vector<16x4xi1>
    %149 = vector.broadcast %cst_37 : f32 to vector<16x4xf32>
    %150 = arith.select %148, %122, %149 : vector<16x4xi1>, vector<16x4xf32>
    %cst_38 = arith.constant dense<0xFF800000> : vector<4xf32>
    %151 = vector.multi_reduction <maximumf>, %150, %cst_38 [0] : vector<16x4xf32> to vector<4xf32>
    %152 = vector.shape_cast %151 : vector<4xf32> to vector<1x4xf32>
    %153 = arith.ori %118, %64 : i1
    %154 = arith.select %153, %2, %152 : vector<1x4xf32>
    %c4_i32_39 = arith.constant 4 : i32
    %155 = arith.muli %1, %c4_i32_39 : i32
    %c2_i32_40 = arith.constant 2 : i32
    %156 = arith.addi %155, %c2_i32_40 : i32
    %157 = arith.index_cast %156 : i32 to index
    %158 = memref.load %arg5[%157] : memref<24xi32, #tpu.memory_space<smem>>
    %c4_i32_41 = arith.constant 4 : i32
    %159 = arith.muli %1, %c4_i32_41 : i32
    %c2_i32_42 = arith.constant 2 : i32
    %160 = arith.addi %159, %c2_i32_42 : i32
    %161 = arith.index_cast %160 : i32 to index
    %162 = memref.load %arg6[%161] : memref<24xi32, #tpu.memory_space<smem>>
    %163 = arith.cmpi sle, %162, %158 : i32
    %cst_43 = arith.constant 0xFF800000 : f32
    %164 = vector.broadcast %cst_43 : f32 to vector<16x4xf32>
    %165 = arith.subi %162, %158 : i32
    %166 = arith.addi %158, %165 : i32
    %c1_i32_44 = arith.constant 1 : i32
    %167 = scf.for %arg11 = %158 to %166 step %c1_i32_44 iter_args(%arg12 = %164) -> (vector<16x4xf32>)  : i32 {
      %c0_69 = arith.constant 0 : index
      %249 = arith.index_cast %arg11 : i32 to index
      %250 = arith.index_cast %5 : i32 to index
      %c0_70 = arith.constant 0 : index
      %251 = vector.load %arg9[%c0_69, %249, %250, %c0_70] : memref<1x16x16x4xf32, #tpu.memory_space<vmem>>, vector<1x1x16x4xf32>
      %252 = vector.shape_cast %251 : vector<1x1x16x4xf32> to vector<16x4xf32>
      %253 = arith.maximumf %arg12, %252 : vector<16x4xf32>
      scf.yield %253 : vector<16x4xf32>
    }
    %cst_45 = arith.constant 0xFF800000 : f32
    %168 = vector.shape_cast %21 : vector<16x1xi1> to vector<16x1xi1>
    %169 = vector.broadcast %168 : vector<16x1xi1> to vector<16x4xi1>
    %170 = vector.broadcast %cst_45 : f32 to vector<16x4xf32>
    %171 = arith.select %169, %167, %170 : vector<16x4xi1>, vector<16x4xf32>
    %cst_46 = arith.constant dense<0xFF800000> : vector<4xf32>
    %172 = vector.multi_reduction <maximumf>, %171, %cst_46 [0] : vector<16x4xf32> to vector<4xf32>
    %173 = vector.shape_cast %172 : vector<4xf32> to vector<1x4xf32>
    %174 = arith.ori %163, %22 : i1
    %175 = arith.select %174, %2, %173 : vector<1x4xf32>
    %cst_47 = arith.constant 0xFF800000 : f32
    %176 = vector.shape_cast %35 : vector<16x1xi1> to vector<16x1xi1>
    %177 = vector.broadcast %176 : vector<16x1xi1> to vector<16x4xi1>
    %178 = vector.broadcast %cst_47 : f32 to vector<16x4xf32>
    %179 = arith.select %177, %167, %178 : vector<16x4xi1>, vector<16x4xf32>
    %cst_48 = arith.constant dense<0xFF800000> : vector<4xf32>
    %180 = vector.multi_reduction <maximumf>, %179, %cst_48 [0] : vector<16x4xf32> to vector<4xf32>
    %181 = vector.shape_cast %180 : vector<4xf32> to vector<1x4xf32>
    %182 = arith.ori %163, %36 : i1
    %183 = arith.select %182, %2, %181 : vector<1x4xf32>
    %cst_49 = arith.constant 0xFF800000 : f32
    %184 = vector.shape_cast %49 : vector<16x1xi1> to vector<16x1xi1>
    %185 = vector.broadcast %184 : vector<16x1xi1> to vector<16x4xi1>
    %186 = vector.broadcast %cst_49 : f32 to vector<16x4xf32>
    %187 = arith.select %185, %167, %186 : vector<16x4xi1>, vector<16x4xf32>
    %cst_50 = arith.constant dense<0xFF800000> : vector<4xf32>
    %188 = vector.multi_reduction <maximumf>, %187, %cst_50 [0] : vector<16x4xf32> to vector<4xf32>
    %189 = vector.shape_cast %188 : vector<4xf32> to vector<1x4xf32>
    %190 = arith.ori %163, %50 : i1
    %191 = arith.select %190, %2, %189 : vector<1x4xf32>
    %cst_51 = arith.constant 0xFF800000 : f32
    %192 = vector.shape_cast %63 : vector<16x1xi1> to vector<16x1xi1>
    %193 = vector.broadcast %192 : vector<16x1xi1> to vector<16x4xi1>
    %194 = vector.broadcast %cst_51 : f32 to vector<16x4xf32>
    %195 = arith.select %193, %167, %194 : vector<16x4xi1>, vector<16x4xf32>
    %cst_52 = arith.constant dense<0xFF800000> : vector<4xf32>
    %196 = vector.multi_reduction <maximumf>, %195, %cst_52 [0] : vector<16x4xf32> to vector<4xf32>
    %197 = vector.shape_cast %196 : vector<4xf32> to vector<1x4xf32>
    %198 = arith.ori %163, %64 : i1
    %199 = arith.select %198, %2, %197 : vector<1x4xf32>
    %c4_i32_53 = arith.constant 4 : i32
    %200 = arith.muli %1, %c4_i32_53 : i32
    %c3_i32_54 = arith.constant 3 : i32
    %201 = arith.addi %200, %c3_i32_54 : i32
    %202 = arith.index_cast %201 : i32 to index
    %203 = memref.load %arg5[%202] : memref<24xi32, #tpu.memory_space<smem>>
    %c4_i32_55 = arith.constant 4 : i32
    %204 = arith.muli %1, %c4_i32_55 : i32
    %c3_i32_56 = arith.constant 3 : i32
    %205 = arith.addi %204, %c3_i32_56 : i32
    %206 = arith.index_cast %205 : i32 to index
    %207 = memref.load %arg6[%206] : memref<24xi32, #tpu.memory_space<smem>>
    %208 = arith.cmpi sle, %207, %203 : i32
    %cst_57 = arith.constant 0xFF800000 : f32
    %209 = vector.broadcast %cst_57 : f32 to vector<16x4xf32>
    %210 = arith.subi %207, %203 : i32
    %211 = arith.addi %203, %210 : i32
    %c1_i32_58 = arith.constant 1 : i32
    %212 = scf.for %arg11 = %203 to %211 step %c1_i32_58 iter_args(%arg12 = %209) -> (vector<16x4xf32>)  : i32 {
      %c0_69 = arith.constant 0 : index
      %249 = arith.index_cast %arg11 : i32 to index
      %250 = arith.index_cast %5 : i32 to index
      %c0_70 = arith.constant 0 : index
      %251 = vector.load %arg9[%c0_69, %249, %250, %c0_70] : memref<1x16x16x4xf32, #tpu.memory_space<vmem>>, vector<1x1x16x4xf32>
      %252 = vector.shape_cast %251 : vector<1x1x16x4xf32> to vector<16x4xf32>
      %253 = arith.maximumf %arg12, %252 : vector<16x4xf32>
      scf.yield %253 : vector<16x4xf32>
    }
    %cst_59 = arith.constant 0xFF800000 : f32
    %213 = vector.shape_cast %21 : vector<16x1xi1> to vector<16x1xi1>
    %214 = vector.broadcast %213 : vector<16x1xi1> to vector<16x4xi1>
    %215 = vector.broadcast %cst_59 : f32 to vector<16x4xf32>
    %216 = arith.select %214, %212, %215 : vector<16x4xi1>, vector<16x4xf32>
    %cst_60 = arith.constant dense<0xFF800000> : vector<4xf32>
    %217 = vector.multi_reduction <maximumf>, %216, %cst_60 [0] : vector<16x4xf32> to vector<4xf32>
    %218 = vector.shape_cast %217 : vector<4xf32> to vector<1x4xf32>
    %219 = arith.ori %208, %22 : i1
    %220 = arith.select %219, %2, %218 : vector<1x4xf32>
    %cst_61 = arith.constant 0xFF800000 : f32
    %221 = vector.shape_cast %35 : vector<16x1xi1> to vector<16x1xi1>
    %222 = vector.broadcast %221 : vector<16x1xi1> to vector<16x4xi1>
    %223 = vector.broadcast %cst_61 : f32 to vector<16x4xf32>
    %224 = arith.select %222, %212, %223 : vector<16x4xi1>, vector<16x4xf32>
    %cst_62 = arith.constant dense<0xFF800000> : vector<4xf32>
    %225 = vector.multi_reduction <maximumf>, %224, %cst_62 [0] : vector<16x4xf32> to vector<4xf32>
    %226 = vector.shape_cast %225 : vector<4xf32> to vector<1x4xf32>
    %227 = arith.ori %208, %36 : i1
    %228 = arith.select %227, %2, %226 : vector<1x4xf32>
    %cst_63 = arith.constant 0xFF800000 : f32
    %229 = vector.shape_cast %49 : vector<16x1xi1> to vector<16x1xi1>
    %230 = vector.broadcast %229 : vector<16x1xi1> to vector<16x4xi1>
    %231 = vector.broadcast %cst_63 : f32 to vector<16x4xf32>
    %232 = arith.select %230, %212, %231 : vector<16x4xi1>, vector<16x4xf32>
    %cst_64 = arith.constant dense<0xFF800000> : vector<4xf32>
    %233 = vector.multi_reduction <maximumf>, %232, %cst_64 [0] : vector<16x4xf32> to vector<4xf32>
    %234 = vector.shape_cast %233 : vector<4xf32> to vector<1x4xf32>
    %235 = arith.ori %208, %50 : i1
    %236 = arith.select %235, %2, %234 : vector<1x4xf32>
    %cst_65 = arith.constant 0xFF800000 : f32
    %237 = vector.shape_cast %63 : vector<16x1xi1> to vector<16x1xi1>
    %238 = vector.broadcast %237 : vector<16x1xi1> to vector<16x4xi1>
    %239 = vector.broadcast %cst_65 : f32 to vector<16x4xf32>
    %240 = arith.select %238, %212, %239 : vector<16x4xi1>, vector<16x4xf32>
    %cst_66 = arith.constant dense<0xFF800000> : vector<4xf32>
    %241 = vector.multi_reduction <maximumf>, %240, %cst_66 [0] : vector<16x4xf32> to vector<4xf32>
    %242 = vector.shape_cast %241 : vector<4xf32> to vector<1x4xf32>
    %243 = arith.ori %208, %64 : i1
    %244 = arith.select %243, %2, %242 : vector<1x4xf32>
    %245 = tpu.concatenate %85, %93, %101, %109, %130, %138, %146, %154, %175, %183, %191, %199, %220, %228, %236, %244 in 0 : vector<1x4xf32>, vector<1x4xf32>, vector<1x4xf32>, vector<1x4xf32>, vector<1x4xf32>, vector<1x4xf32>, vector<1x4xf32>, vector<1x4xf32>, vector<1x4xf32>, vector<1x4xf32>, vector<1x4xf32>, vector<1x4xf32>, vector<1x4xf32>, vector<1x4xf32>, vector<1x4xf32>, vector<1x4xf32> -> vector<16x4xf32>
    %c0 = arith.constant 0 : index
    %c0_67 = arith.constant 0 : index
    %c0_68 = arith.constant 0 : index
    %246 = vector.load %arg10[%c0, %c0_67, %c0_68] : memref<1x16x4xf32, #tpu.memory_space<vmem>>, vector<1x16x4xf32>
    %247 = vector.shape_cast %246 : vector<1x16x4xf32> to vector<16x4xf32>
    %248 = vector.shape_cast %245 : vector<16x4xf32> to vector<1x16x4xf32>
    tpu.vector_store %arg10[%c0, %c0_67, %c0_68], %248 {strides = array<i32>} : memref<1x16x4xf32, #tpu.memory_space<vmem>>, vector<1x16x4xf32>,
    return
  }
  func.func @transform_0(%arg0: i32, %arg1: i32, %arg2: i32, %arg3: memref<6xi32, #tpu.memory_space<smem>>, %arg4: memref<6xi32, #tpu.memory_space<smem>>, %arg5: memref<24xi32, #tpu.memory_space<smem>>, %arg6: memref<24xi32, #tpu.memory_space<smem>>, %arg7: memref<24xi32, #tpu.memory_space<smem>>, %arg8: memref<24xi32, #tpu.memory_space<smem>>) -> (i32, i32, i32, i32) {
    %c6_i32 = arith.constant 6 : i32
    %0 = arith.muli %arg1, %c6_i32 : i32
    %1 = arith.addi %0, %arg2 : i32
    %2 = arith.index_cast %1 : i32 to index
    %3 = memref.load %arg3[%2] : memref<6xi32, #tpu.memory_space<smem>>
    %c0_i32 = arith.constant 0 : i32
    %c0_i32_0 = arith.constant 0 : i32
    %c0_i32_1 = arith.constant 0 : i32
    return %3, %c0_i32, %c0_i32_0, %arg0 : i32, i32, i32, i32
  }
  func.func @transform_1(%arg0: i32, %arg1: i32, %arg2: i32, %arg3: memref<6xi32, #tpu.memory_space<smem>>, %arg4: memref<6xi32, #tpu.memory_space<smem>>, %arg5: memref<24xi32, #tpu.memory_space<smem>>, %arg6: memref<24xi32, #tpu.memory_space<smem>>, %arg7: memref<24xi32, #tpu.memory_space<smem>>, %arg8: memref<24xi32, #tpu.memory_space<smem>>) -> (i32, i32, i32) {
    %c6_i32 = arith.constant 6 : i32
    %0 = arith.muli %arg1, %c6_i32 : i32
    %1 = arith.addi %0, %arg2 : i32
    %c0_i32 = arith.constant 0 : i32
    %c0_i32_0 = arith.constant 0 : i32
    return %1, %c0_i32, %arg0 : i32, i32, i32
  }
}

</mosaic_0001>

<llo_original>
// kernel: tpu_custom_call.1
$region0: #{tpu_custom_call.1}
  #allocation0 [shape = 'u32[]', space=smem, size = 0x4, offset = 0x4, fixed_abs, tag = 'smem constant byte address 0x4 - core index']
  #allocation1 [shape = 'u32[72,128]{1,0:T(1,128)}', space=vmem, size = 0x9000, scoped, tag = 'internal scratch']
  #allocation2 [shape = 's32[1]{0}', space=sflag, size = 0x4, scoped, tag = 'scoped memory for tpu_custom_call.1']
  #allocation3 [shape = 'u8[512]{0}', space=smem, size = 0x200, scoped, tag = 'prefetched SMEM operand 0']
  #allocation4 [shape = 'u8[512]{0}', space=smem, size = 0x200, scoped, tag = 'prefetched SMEM operand 1']
  #allocation5 [shape = 'u8[512]{0}', space=smem, size = 0x200, scoped, tag = 'prefetched SMEM operand 2']
  #allocation6 [shape = 'u8[512]{0}', space=smem, size = 0x200, scoped, tag = 'prefetched SMEM operand 3']
  #allocation7 [shape = 'u8[512]{0}', space=smem, size = 0x200, scoped, tag = 'prefetched SMEM operand 4']
  #allocation8 [shape = 'u8[512]{0}', space=smem, size = 0x200, scoped, tag = 'prefetched SMEM operand 5']
  %s0 = inlined_call_operand.vmem [shape: s32[6], index: 0, kind: input, shape index: {}]
  %s1 = inlined_call_operand.vmem [shape: s32[6], index: 1, kind: input, shape index: {}]
  %s2 = inlined_call_operand.vmem [shape: s32[24], index: 2, kind: input, shape index: {}]
  %s3 = inlined_call_operand.vmem [shape: s32[24], index: 3, kind: input, shape index: {}]
  %s4 = inlined_call_operand.vmem [shape: s32[24], index: 4, kind: input, shape index: {}]
  %s5 = inlined_call_operand.vmem [shape: s32[24], index: 5, kind: input, shape index: {}]
  %s6 = inlined_call_operand.vmem [shape: f32[2,16,16,4], index: 6, kind: input, shape index: {}]
  %s7 = inlined_call_operand.vmem [shape: f32[6,16,4], index: 7, kind: output, shape index: {}]
  %s8 = sld [smem:[#allocation0]]
  $region65: #{tpu_custom_call.1} parent=0
    _
  %s10 = ssub.s32 1, %s8
  %s11 = scalar_select 0, %s10, %s8
  %s13 = sshll.u32 %s0, 4
  %s14 = int_to_ptr.vmem [resolvable:$true] %s13
  %16 = dma.vmem_to_smem %s14, 16, [#allocation3], [#allocation2]
  %s18 = sshll.u32 %s1, 4
  %s19 = int_to_ptr.vmem [resolvable:$true] %s18
  %21 = dma.vmem_to_smem %s19, 16, [#allocation4], [#allocation2]
  %s23 = sshll.u32 %s2, 4
  %s24 = int_to_ptr.vmem [resolvable:$true] %s23
  %26 = dma.vmem_to_smem %s24, 16, [#allocation5], [#allocation2]
  %s28 = sshll.u32 %s3, 4
  %s29 = int_to_ptr.vmem [resolvable:$true] %s28
  %31 = dma.vmem_to_smem %s29, 16, [#allocation6], [#allocation2]
  %s33 = sshll.u32 %s4, 4
  %s34 = int_to_ptr.vmem [resolvable:$true] %s33
  %36 = dma.vmem_to_smem %s34, 16, [#allocation7], [#allocation2]
  %s38 = sshll.u32 %s5, 4
  %s39 = int_to_ptr.vmem [resolvable:$true] %s38
  %41 = dma.vmem_to_smem %s39, 16, [#allocation8], [#allocation2]
  %43 = dma.done [#allocation2], 96
  %44 = sfence
  loop: start=0, step=1, limit=8
  $region2: #{tpu_custom_call.1} parent=0 // loop_pre_header
    _
  $region3: #{tpu_custom_call.1} parent=0 // loop_header
    %s46 = sphi 0, %s50
    %p47 = scmp.ge.s32.totalorder %s46, 8
    %s53 = sphi 0, %s72
    %s54 = sphi 0, %s68
    %s55 = sphi 0, %s64
    %s56 = sphi 0, %s53
    %s57 = sphi 0, %s54
    %s58 = sphi 0, %s55
    %s59 = sphi 0, %s56
    %s60 = sphi 0, %s57
    %s61 = sphi 0, %s58
    %s83 = sphi 0, %s85
    %s86 = sphi 0, %s83
    %s87 = sphi 0, %s86
    %s103 = sphi 0, %s87
    %s115 = sphi 0, %s117
    %s118 = sphi 0, %s115
    %s119 = sphi 0, %s118
    %s135 = sphi 0, %s119
  $region4: #{tpu_custom_call.1} parent=0 // loop_header_branch
    %49 = sbr.rel (%p47) target = $region8
  $region5: #{tpu_custom_call.1} parent=0 // loop_body
    %s51 = ssub.s32 %s46, 1
    %s52 = ssub.s32 %s46, 2
    %s62 = sadd.s32 1, %s55
    %p63 = scmp.ge.s32.totalorder %s62, 6
    %s64 = scalar_select %p63, 0, %s62
    %s65 = sadd.s32 1, %s54
    %s66 = scalar_select %p63, %s65, %s54
    %p67 = scmp.ge.s32.totalorder %s66, 1
    %s68 = scalar_select %p67, 0, %s66
    %s69 = sadd.s32 1, %s53
    %s70 = scalar_select %p67, %s69, %s53
    %p71 = scmp.ge.s32.totalorder %s70, 1
    %s72 = scalar_select %p71, 0, %s70
    %s73 = smul.u32 %s54, 6
    %s74 = sadd.s32 %s73, %s55
    %s75 = sld [smem:[#allocation3 + %s74]]
    %s76 = smul.u32 %s68, 6
    %s77 = sadd.s32 %s76, %s64
    %s78 = sld [smem:[#allocation3 + %s77]]
    %s79 = ssub.s32 %s75, %s78
    %s80 = ssub.s32 %s53, %s72
    %s81 = sor.u32 %s79, %s80
    %p82 = scmp.eq.s32.totalorder %s81, 0
    %s84 = sadd.s32 %s83, 1
    %s85 = scalar_select %p82, %s83, %s84
    %p88 = pneg %p82
    %p89 = scmp.eq.s32.totalorder %s46, 5
    %p90 = por %p88, %p89
    %p91 = scmp.ne.s32.totalorder %s83, %s86
    %p92 = scmp.eq.s32.totalorder %s46, 0
    %p93 = por %p91, %p92
    %p94 = scmp.ne.s32.totalorder %s83, %s86
    %p95 = scmp.eq.s32.totalorder %s51, 5
    %p96 = por %p94, %p95
    %p97 = scmp.ne.s32.totalorder %s86, %s87
    %p98 = scmp.eq.s32.totalorder %s51, 0
    %p99 = por %p97, %p98
    %p100 = scmp.ne.s32.totalorder %s86, %s87
    %p101 = scmp.eq.s32.totalorder %s52, 5
    %p102 = por %p100, %p101
    %p104 = scmp.ne.s32.totalorder %s87, %s103
    %p105 = scmp.eq.s32.totalorder %s52, 0
    %p106 = por %p104, %p105
    %s107 = smul.u32 %s54, 6
    %s108 = sadd.s32 %s107, %s55
    %s109 = smul.u32 %s68, 6
    %s110 = sadd.s32 %s109, %s64
    %s111 = ssub.s32 %s108, %s110
    %s112 = ssub.s32 %s53, %s72
    %s113 = sor.u32 %s111, %s112
    %p114 = scmp.eq.s32.totalorder %s113, 0
    %s116 = sadd.s32 %s115, 1
    %s117 = scalar_select %p114, %s115, %s116
    %p120 = pneg %p114
    %p121 = scmp.eq.s32.totalorder %s46, 5
    %p122 = por %p120, %p121
    %p123 = scmp.ne.s32.totalorder %s115, %s118
    %p124 = scmp.eq.s32.totalorder %s46, 0
    %p125 = por %p123, %p124
    %p126 = scmp.ne.s32.totalorder %s115, %s118
    %p127 = scmp.eq.s32.totalorder %s51, 5
    %p128 = por %p126, %p127
    %p129 = scmp.ne.s32.totalorder %s118, %s119
    %p130 = scmp.eq.s32.totalorder %s51, 0
    %p131 = por %p129, %p130
    %p132 = scmp.ne.s32.totalorder %s118, %s119
    %p133 = scmp.eq.s32.totalorder %s52, 5
    %p134 = por %p132, %p133
    %p136 = scmp.ne.s32.totalorder %s119, %s135
    %p137 = scmp.eq.s32.totalorder %s52, 0
    %p138 = por %p136, %p137
    %p139 = scmp.le.s32.totalorder 1, %s46
    %p140 = scmp.lt.s32.totalorder %s46, 7
    %p141 = pnand %p139, %p140
    %p142 = pneg %p141
    // Predicated region
    $region9: #{tpu_custom_call.1} parent=5 // pred_check
      _
    $region10: #{tpu_custom_call.1} parent=5 // pred_check_branch
      %144 = sbr.rel (%p141) target = $region12
    $region11: #{tpu_custom_call.1} parent=5 // pred_region
      %s145 = ssub.s32 %s46, 1
    $region12: #{tpu_custom_call.1} parent=5 // pred_fallthru
      _
    %p146 = scmp.lt.s32.totalorder %s46, 6
    // Predicated region
    $region13: #{tpu_custom_call.1} parent=5 // pred_check
      %p147 = pneg %p146
    $region14: #{tpu_custom_call.1} parent=5 // pred_check_branch
      %149 = sbr.rel (%p147) target = $region16
    $region15: #{tpu_custom_call.1} parent=5 // pred_region
      // Predicated region
      $region17: #{tpu_custom_call.1} parent=15 // pred_check
        %p150 = pneg %p93
      $region18: #{tpu_custom_call.1} parent=15 // pred_check_branch
        %152 = sbr.rel (%p150) target = $region20
      $region19: #{tpu_custom_call.1} parent=15 // pred_region
        %s153 = smul.u32 %s54, 6
        %s154 = sadd.s32 %s153, %s55
        %s155 = sld [smem:[#allocation3 + %s154]]
        %p156 = scmp.lt.s32.totalorder %s155, 1
        %s157 = scalar_select %p156, %s155, 1
        %p158 = scmp.lt.s32.totalorder %s53, 0
        %s159 = scalar_select %p158, %s53, 0
        %s160 = smul.addr %s157, 32
        %s161 = sadd.s32 %s159, %s160
        %s162 = smul.addr %s161, 8
        %s163 = scalar_lea.vmem %s6, %s162
        %s164 = smul.u32 %s54, 6
        %s165 = sadd.s32 %s164, %s55
        %s166 = sld [smem:[#allocation3 + %s165]]
      $region20: #{tpu_custom_call.1} parent=15 // pred_fallthru
        _
    $region16: #{tpu_custom_call.1} parent=5 // pred_fallthru
      _
    %p167 = scmp.le.s32.totalorder 1, %s46
    %p168 = scmp.lt.s32.totalorder %s46, 7
    %p169 = pnand %p167, %p168
    %p170 = pneg %p169
    // Predicated region
    $region21: #{tpu_custom_call.1} parent=5 // pred_check
      _
    $region22: #{tpu_custom_call.1} parent=5 // pred_check_branch
      %172 = sbr.rel (%p169) target = $region24
    $region23: #{tpu_custom_call.1} parent=5 // pred_region
      %s173 = ssub.s32 %s46, 1
      %s174 = smul.u32 %s57, 6
      %s175 = sadd.s32 %s174, %s58
      %s176 = sld [smem:[#allocation3 + %s175]]
      %p177 = scmp.lt.s32.totalorder %s176, 1
      %s178 = scalar_select %p177, %s176, 1
      %p179 = scmp.lt.s32.totalorder %s56, 0
      %s180 = scalar_select %p179, %s56, 0
      %s181 = smul.addr %s178, 32
      %s182 = sadd.s32 %s180, %s181
      %s183 = smul.addr %s182, 8
      %s184 = scalar_lea.vmem %s6, %s183
      %p185 = pneg %p99
      %p186 = pneg %p96
      %p187 = pneg %p131
      %p188 = pneg %p128
      %s189 = smul.u32 %s57, 6
      %s190 = sadd.s32 %s189, %s58
      %p191 = scmp.lt.s32.totalorder %s190, 5
      %s192 = scalar_select %p191, %s190, 5
      %p193 = scmp.lt.s32.totalorder %s56, 0
      %s194 = scalar_select %p193, %s56, 0
      %s195 = smul.addr %s192, 2
      %s196 = sadd.s32 %s194, %s195
      %s197 = smul.addr %s196, 8
      %s198 = scalar_lea.vmem %s7, %s197
      %s199 = smul.u32 %s57, 6
      %s200 = sadd.s32 %s199, %s58
      %s201 = sld [smem:[#allocation3 + %s200]]
      %p202 = scmp.lt.s32.totalorder %s201, 1
      %s203 = scalar_select %p202, %s201, 1
      %p204 = scmp.lt.s32.totalorder %s56, 0
      %s205 = scalar_select %p204, %s56, 0
      %s206 = smul.addr %s203, 32
      %s207 = sadd.s32 %s205, %s206
      %s208 = smul.addr %s207, 8
      %s209 = scalar_lea.vmem %s6, %s208
      %s210 = smul.u32 %s57, 6
      %s211 = sadd.s32 %s210, %s58
      %s212 = sld [smem:[#allocation3 + %s211]]
      %s213 = smul.u32 %s57, 6
      %s214 = sadd.s32 %s213, %s58
      %p215 = scmp.lt.s32.totalorder %s214, 5
      %s216 = scalar_select %p215, %s214, 5
      %p217 = scmp.lt.s32.totalorder %s56, 0
      %s218 = scalar_select %p217, %s56, 0
      %s219 = smul.addr %s216, 2
      %s220 = sadd.s32 %s218, %s219
      %s221 = smul.addr %s220, 8
      %s222 = scalar_lea.vmem %s7, %s221
      %s223 = smul.u32 %s57, 6
      %s224 = sadd.s32 %s223, %s58
      %s225 = smul.u32 %s57, 6
      %s226 = sadd.s32 %s225, %s58
      %s227 = sld [smem:[#allocation4 + %s226]]
      %v228 = vlaneseq
      %v229 = vshrl.u32 %v228, 7
      %v230 = vadd.s32 %v229, 8
      %v231 = vstv %s227
      %v232 = vadd.s32 %v229, %v231
      %v233 = vadd.s32 %v230, %v231
      %s234 = smul.u32 %s226, 4
      %s235 = sld [smem:[#allocation7 + %s234]]
      %s236 = sld [smem:[#allocation8 + %s234]]
      %v237 = vstv %s235
      %vm238 = vcmp.ge.s32.totalorder %v232, %v237
      %vm239 = vcmp.ge.s32.totalorder %v233, %v237
      %v240 = vstv %s236
      %vm241 = vcmp.lt.s32.totalorder %v232, %v240
      %vm242 = vcmp.lt.s32.totalorder %v233, %v240
      %vm243 = vmand %vm238, %vm241
      %vm244 = vmand %vm239, %vm242
      %p245 = scmp.le.s32.totalorder %s236, %s235
      %s246 = sadd.s32 %s234, 1
      %s247 = sld [smem:[#allocation7 + %s246]]
      %s248 = sld [smem:[#allocation8 + %s246]]
      %v249 = vstv %s247
      %vm250 = vcmp.ge.s32.totalorder %v232, %v249
      %vm251 = vcmp.ge.s32.totalorder %v233, %v249
      %v252 = vstv %s248
      %vm253 = vcmp.lt.s32.totalorder %v232, %v252
      %vm254 = vcmp.lt.s32.totalorder %v233, %v252
      %vm255 = vmand %vm250, %vm253
      %vm256 = vmand %vm251, %vm254
      %p257 = scmp.le.s32.totalorder %s248, %s247
      %s258 = sadd.s32 %s234, 2
      %s259 = sld [smem:[#allocation7 + %s258]]
      %s260 = sld [smem:[#allocation8 + %s258]]
      %v261 = vstv %s259
      %vm262 = vcmp.ge.s32.totalorder %v232, %v261
      %vm263 = vcmp.ge.s32.totalorder %v233, %v261
      %v264 = vstv %s260
      %vm265 = vcmp.lt.s32.totalorder %v232, %v264
      %vm266 = vcmp.lt.s32.totalorder %v233, %v264
      %vm267 = vmand %vm262, %vm265
      %vm268 = vmand %vm263, %vm266
      %p269 = scmp.le.s32.totalorder %s260, %s259
      %s270 = sadd.s32 %s234, 3
      %s271 = sld [smem:[#allocation7 + %s270]]
      %s272 = sld [smem:[#allocation8 + %s270]]
      %v273 = vstv %s271
      %vm274 = vcmp.ge.s32.totalorder %v232, %v273
      %vm275 = vcmp.ge.s32.totalorder %v233, %v273
      %v276 = vstv %s272
      %vm277 = vcmp.lt.s32.totalorder %v232, %v276
      %vm278 = vcmp.lt.s32.totalorder %v233, %v276
      %vm279 = vmand %vm274, %vm277
      %vm280 = vmand %vm275, %vm278
      %p281 = scmp.le.s32.totalorder %s272, %s271
      %s282 = sld [smem:[#allocation5 + %s234]]
      %s283 = sld [smem:[#allocation6 + %s234]]
      %p284 = scmp.le.s32.totalorder %s283, %s282
      // While loop
      $region25: #{tpu_custom_call.1} parent=23 // loop_pre_header
        _
      $region26: #{tpu_custom_call.1} parent=23 // loop_header
        %s286 = sphi %s282, %s288
        %p287 = scmp.ge.s32.totalorder %s286, %s283
        %v291 = vphi -inf, %v298
        %v292 = vphi -inf, %v299
      $region27: #{tpu_custom_call.1} parent=23 // loop_header_branch
        %290 = sbr.rel (%p287) target = $region31
      $region28: #{tpu_custom_call.1} parent=23 // loop_body
        %s293 = smul.u32 %s286, 16
        %s294 = sadd.s32 %s227, %s293
        %s295 = scalar_lea.vmem %s209, %s294
        %v296 = vld [vmem:[%s295] sm:$0xff]
        %v297 = vld [vmem:[%s295 + $0x8] sm:$0xff]
        %v298 = vmax.f32 %v291, %v296
        %v299 = vmax.f32 %v292, %v297
      $region29: #{tpu_custom_call.1} parent=23 // loop_footer
        %s288 = sadd.s32 %s286, 1
      $region30: #{tpu_custom_call.1} parent=23 // loop_footer_branch
        %285 = sbr.rel target = $region26
      $region31: #{tpu_custom_call.1} parent=23 // loop_exit
        _
      %v300 = vsel %vm243, 1, 0
      %v301 = vsel %vm244, 1, 0
      %vm302 = vcmp.eq.s32.totalorder %v300, 1
      %vm303 = vcmp.eq.s32.totalorder %v301, 1
      %v304 = vsel %vm302, %v291, -inf
      %v305 = vsel %vm303, %v292, -inf
      %vm306 = vcmask 31744
      %v307 = vsel %vm306, %v304, -inf
      %v308 = vsel %vm306, %v305, -inf
      %v309 = vmax.f32 %v307, %v308
      %v310 = vrot.slane %v309, 4
      %v311 = vmax.f32 %v309, %v310
      %v312 = vrot.slane %v311, 2
      %v313 = vmax.f32 %v311, %v312
      %v314 = vrot.slane %v313, 1
      %v315 = vmax.f32 %v313, %v314
      %p316 = por %p284, %p245
      %s317 = scalar_select %p316, 1, 0
      %v318 = vstv %s317
      %vm319 = vcmp.eq.s32.totalorder %v318, 1
      %v320 = vsel %vm319, 0.0, %v315
      %v321 = vsel %vm255, 1, 0
      %v322 = vsel %vm256, 1, 0
      %vm323 = vcmp.eq.s32.totalorder %v321, 1
      %vm324 = vcmp.eq.s32.totalorder %v322, 1
      %v325 = vsel %vm323, %v291, -inf
      %v326 = vsel %vm324, %v292, -inf
      %v327 = vsel %vm306, %v325, -inf
      %v328 = vsel %vm306, %v326, -inf
      %v329 = vmax.f32 %v327, %v328
      %v330 = vrot.slane %v329, 4
      %v331 = vmax.f32 %v329, %v330
      %v332 = vrot.slane %v331, 2
      %v333 = vmax.f32 %v331, %v332
      %v334 = vrot.slane %v333, 1
      %v335 = vmax.f32 %v333, %v334
      %p336 = por %p284, %p257
      %s337 = scalar_select %p336, 1, 0
      %v338 = vstv %s337
      %vm339 = vcmp.eq.s32.totalorder %v338, 1
      %v340 = vsel %vm339, 0.0, %v335
      %v341 = vsel %vm267, 1, 0
      %v342 = vsel %vm268, 1, 0
      %vm343 = vcmp.eq.s32.totalorder %v341, 1
      %vm344 = vcmp.eq.s32.totalorder %v342, 1
      %v345 = vsel %vm343, %v291, -inf
      %v346 = vsel %vm344, %v292, -inf
      %v347 = vsel %vm306, %v345, -inf
      %v348 = vsel %vm306, %v346, -inf
      %v349 = vmax.f32 %v347, %v348
      %v350 = vrot.slane %v349, 4
      %v351 = vmax.f32 %v349, %v350
      %v352 = vrot.slane %v351, 2
      %v353 = vmax.f32 %v351, %v352
      %v354 = vrot.slane %v353, 1
      %v355 = vmax.f32 %v353, %v354
      %p356 = por %p284, %p269
      %s357 = scalar_select %p356, 1, 0
      %v358 = vstv %s357
      %vm359 = vcmp.eq.s32.totalorder %v358, 1
      %v360 = vsel %vm359, 0.0, %v355
      %v361 = vsel %vm279, 1, 0
      %v362 = vsel %vm280, 1, 0
      %vm363 = vcmp.eq.s32.totalorder %v361, 1
      %vm364 = vcmp.eq.s32.totalorder %v362, 1
      %v365 = vsel %vm363, %v291, -inf
      %v366 = vsel %vm364, %v292, -inf
      %v367 = vsel %vm306, %v365, -inf
      %v368 = vsel %vm306, %v366, -inf
      %v369 = vmax.f32 %v367, %v368
      %v370 = vrot.slane %v369, 4
      %v371 = vmax.f32 %v369, %v370
      %v372 = vrot.slane %v371, 2
      %v373 = vmax.f32 %v371, %v372
      %v374 = vrot.slane %v373, 1
      %v375 = vmax.f32 %v373, %v374
      %p376 = por %p284, %p281
      %s377 = scalar_select %p376, 1, 0
      %v378 = vstv %s377
      %vm379 = vcmp.eq.s32.totalorder %v378, 1
      %v380 = vsel %vm379, 0.0, %v375
      %s381 = sld [smem:[#allocation5 + %s246]]
      %s382 = sld [smem:[#allocation6 + %s246]]
      %p383 = scmp.le.s32.totalorder %s382, %s381
      // While loop
      $region32: #{tpu_custom_call.1} parent=23 // loop_pre_header
        _
      $region33: #{tpu_custom_call.1} parent=23 // loop_header
        %s385 = sphi %s381, %s387
        %p386 = scmp.ge.s32.totalorder %s385, %s382
        %v390 = vphi -inf, %v397
        %v391 = vphi -inf, %v398
      $region34: #{tpu_custom_call.1} parent=23 // loop_header_branch
        %389 = sbr.rel (%p386) target = $region38
      $region35: #{tpu_custom_call.1} parent=23 // loop_body
        %s392 = smul.u32 %s385, 16
        %s393 = sadd.s32 %s227, %s392
        %s394 = scalar_lea.vmem %s209, %s393
        %v395 = vld [vmem:[%s394] sm:$0xff]
        %v396 = vld [vmem:[%s394 + $0x8] sm:$0xff]
        %v397 = vmax.f32 %v390, %v395
        %v398 = vmax.f32 %v391, %v396
      $region36: #{tpu_custom_call.1} parent=23 // loop_footer
        %s387 = sadd.s32 %s385, 1
      $region37: #{tpu_custom_call.1} parent=23 // loop_footer_branch
        %384 = sbr.rel target = $region33
      $region38: #{tpu_custom_call.1} parent=23 // loop_exit
        _
      %v399 = vsel %vm302, %v390, -inf
      %v400 = vsel %vm303, %v391, -inf
      %v401 = vsel %vm306, %v399, -inf
      %v402 = vsel %vm306, %v400, -inf
      %v403 = vmax.f32 %v401, %v402
      %v404 = vrot.slane %v403, 4
      %v405 = vmax.f32 %v403, %v404
      %v406 = vrot.slane %v405, 2
      %v407 = vmax.f32 %v405, %v406
      %v408 = vrot.slane %v407, 1
      %v409 = vmax.f32 %v407, %v408
      %p410 = por %p383, %p245
      %s411 = scalar_select %p410, 1, 0
      %v412 = vstv %s411
      %vm413 = vcmp.eq.s32.totalorder %v412, 1
      %v414 = vsel %vm413, 0.0, %v409
      %v415 = vsel %vm323, %v390, -inf
      %v416 = vsel %vm324, %v391, -inf
      %v417 = vsel %vm306, %v415, -inf
      %v418 = vsel %vm306, %v416, -inf
      %v419 = vmax.f32 %v417, %v418
      %v420 = vrot.slane %v419, 4
      %v421 = vmax.f32 %v419, %v420
      %v422 = vrot.slane %v421, 2
      %v423 = vmax.f32 %v421, %v422
      %v424 = vrot.slane %v423, 1
      %v425 = vmax.f32 %v423, %v424
      %p426 = por %p383, %p257
      %s427 = scalar_select %p426, 1, 0
      %v428 = vstv %s427
      %vm429 = vcmp.eq.s32.totalorder %v428, 1
      %v430 = vsel %vm429, 0.0, %v425
      %v431 = vsel %vm343, %v390, -inf
      %v432 = vsel %vm344, %v391, -inf
      %v433 = vsel %vm306, %v431, -inf
      %v434 = vsel %vm306, %v432, -inf
      %v435 = vmax.f32 %v433, %v434
      %v436 = vrot.slane %v435, 4
      %v437 = vmax.f32 %v435, %v436
      %v438 = vrot.slane %v437, 2
      %v439 = vmax.f32 %v437, %v438
      %v440 = vrot.slane %v439, 1
      %v441 = vmax.f32 %v439, %v440
      %p442 = por %p383, %p269
      %s443 = scalar_select %p442, 1, 0
      %v444 = vstv %s443
      %vm445 = vcmp.eq.s32.totalorder %v444, 1
      %v446 = vsel %vm445, 0.0, %v441
      %v447 = vsel %vm363, %v390, -inf
      %v448 = vsel %vm364, %v391, -inf
      %v449 = vsel %vm306, %v447, -inf
      %v450 = vsel %vm306, %v448, -inf
      %v451 = vmax.f32 %v449, %v450
      %v452 = vrot.slane %v451, 4
      %v453 = vmax.f32 %v451, %v452
      %v454 = vrot.slane %v453, 2
      %v455 = vmax.f32 %v453, %v454
      %v456 = vrot.slane %v455, 1
      %v457 = vmax.f32 %v455, %v456
      %p458 = por %p383, %p281
      %s459 = scalar_select %p458, 1, 0
      %v460 = vstv %s459
      %vm461 = vcmp.eq.s32.totalorder %v460, 1
      %v462 = vsel %vm461, 0.0, %v457
      %s463 = sld [smem:[#allocation5 + %s258]]
      %s464 = sld [smem:[#allocation6 + %s258]]
      %p465 = scmp.le.s32.totalorder %s464, %s463
      // While loop
      $region39: #{tpu_custom_call.1} parent=23 // loop_pre_header
        _
      $region40: #{tpu_custom_call.1} parent=23 // loop_header
        %s467 = sphi %s463, %s469
        %p468 = scmp.ge.s32.totalorder %s467, %s464
        %v472 = vphi -inf, %v479
        %v473 = vphi -inf, %v480
      $region41: #{tpu_custom_call.1} parent=23 // loop_header_branch
        %471 = sbr.rel (%p468) target = $region45
      $region42: #{tpu_custom_call.1} parent=23 // loop_body
        %s474 = smul.u32 %s467, 16
        %s475 = sadd.s32 %s227, %s474
        %s476 = scalar_lea.vmem %s209, %s475
        %v477 = vld [vmem:[%s476] sm:$0xff]
        %v478 = vld [vmem:[%s476 + $0x8] sm:$0xff]
        %v479 = vmax.f32 %v472, %v477
        %v480 = vmax.f32 %v473, %v478
      $region43: #{tpu_custom_call.1} parent=23 // loop_footer
        %s469 = sadd.s32 %s467, 1
      $region44: #{tpu_custom_call.1} parent=23 // loop_footer_branch
        %466 = sbr.rel target = $region40
      $region45: #{tpu_custom_call.1} parent=23 // loop_exit
        _
      %v481 = vsel %vm302, %v472, -inf
      %v482 = vsel %vm303, %v473, -inf
      %v483 = vsel %vm306, %v481, -inf
      %v484 = vsel %vm306, %v482, -inf
      %v485 = vmax.f32 %v483, %v484
      %v486 = vrot.slane %v485, 4
      %v487 = vmax.f32 %v485, %v486
      %v488 = vrot.slane %v487, 2
      %v489 = vmax.f32 %v487, %v488
      %v490 = vrot.slane %v489, 1
      %v491 = vmax.f32 %v489, %v490
      %p492 = por %p465, %p245
      %s493 = scalar_select %p492, 1, 0
      %v494 = vstv %s493
      %vm495 = vcmp.eq.s32.totalorder %v494, 1
      %v496 = vsel %vm495, 0.0, %v491
      %v497 = vsel %vm323, %v472, -inf
      %v498 = vsel %vm324, %v473, -inf
      %v499 = vsel %vm306, %v497, -inf
      %v500 = vsel %vm306, %v498, -inf
      %v501 = vmax.f32 %v499, %v500
      %v502 = vrot.slane %v501, 4
      %v503 = vmax.f32 %v501, %v502
      %v504 = vrot.slane %v503, 2
      %v505 = vmax.f32 %v503, %v504
      %v506 = vrot.slane %v505, 1
      %v507 = vmax.f32 %v505, %v506
      %p508 = por %p465, %p257
      %s509 = scalar_select %p508, 1, 0
      %v510 = vstv %s509
      %vm511 = vcmp.eq.s32.totalorder %v510, 1
      %v512 = vsel %vm511, 0.0, %v507
      %v513 = vsel %vm343, %v472, -inf
      %v514 = vsel %vm344, %v473, -inf
      %v515 = vsel %vm306, %v513, -inf
      %v516 = vsel %vm306, %v514, -inf
      %v517 = vmax.f32 %v515, %v516
      %v518 = vrot.slane %v517, 4
      %v519 = vmax.f32 %v517, %v518
      %v520 = vrot.slane %v519, 2
      %v521 = vmax.f32 %v519, %v520
      %v522 = vrot.slane %v521, 1
      %v523 = vmax.f32 %v521, %v522
      %p524 = por %p465, %p269
      %s525 = scalar_select %p524, 1, 0
      %v526 = vstv %s525
      %vm527 = vcmp.eq.s32.totalorder %v526, 1
      %v528 = vsel %vm527, 0.0, %v523
      %v529 = vsel %vm363, %v472, -inf
      %v530 = vsel %vm364, %v473, -inf
      %v531 = vsel %vm306, %v529, -inf
      %v532 = vsel %vm306, %v530, -inf
      %v533 = vmax.f32 %v531, %v532
      %v534 = vrot.slane %v533, 4
      %v535 = vmax.f32 %v533, %v534
      %v536 = vrot.slane %v535, 2
      %v537 = vmax.f32 %v535, %v536
      %v538 = vrot.slane %v537, 1
      %v539 = vmax.f32 %v537, %v538
      %p540 = por %p465, %p281
      %s541 = scalar_select %p540, 1, 0
      %v542 = vstv %s541
      %vm543 = vcmp.eq.s32.totalorder %v542, 1
      %v544 = vsel %vm543, 0.0, %v539
      %s545 = sld [smem:[#allocation5 + %s270]]
      %s546 = sld [smem:[#allocation6 + %s270]]
      %p547 = scmp.le.s32.totalorder %s546, %s545
      // While loop
      $region46: #{tpu_custom_call.1} parent=23 // loop_pre_header
        _
      $region47: #{tpu_custom_call.1} parent=23 // loop_header
        %s549 = sphi %s545, %s551
        %p550 = scmp.ge.s32.totalorder %s549, %s546
        %v554 = vphi -inf, %v561
        %v555 = vphi -inf, %v562
      $region48: #{tpu_custom_call.1} parent=23 // loop_header_branch
        %553 = sbr.rel (%p550) target = $region52
      $region49: #{tpu_custom_call.1} parent=23 // loop_body
        %s556 = smul.u32 %s549, 16
        %s557 = sadd.s32 %s227, %s556
        %s558 = scalar_lea.vmem %s209, %s557
        %v559 = vld [vmem:[%s558] sm:$0xff]
        %v560 = vld [vmem:[%s558 + $0x8] sm:$0xff]
        %v561 = vmax.f32 %v554, %v559
        %v562 = vmax.f32 %v555, %v560
      $region50: #{tpu_custom_call.1} parent=23 // loop_footer
        %s551 = sadd.s32 %s549, 1
      $region51: #{tpu_custom_call.1} parent=23 // loop_footer_branch
        %548 = sbr.rel target = $region47
      $region52: #{tpu_custom_call.1} parent=23 // loop_exit
        _
      %v563 = vsel %vm302, %v554, -inf
      %v564 = vsel %vm303, %v555, -inf
      %v565 = vsel %vm306, %v563, -inf
      %v566 = vsel %vm306, %v564, -inf
      %v567 = vmax.f32 %v565, %v566
      %v568 = vrot.slane %v567, 4
      %v569 = vmax.f32 %v567, %v568
      %v570 = vrot.slane %v569, 2
      %v571 = vmax.f32 %v569, %v570
      %v572 = vrot.slane %v571, 1
      %v573 = vmax.f32 %v571, %v572
      %p574 = por %p547, %p245
      %s575 = scalar_select %p574, 1, 0
      %v576 = vstv %s575
      %vm577 = vcmp.eq.s32.totalorder %v576, 1
      %v578 = vsel %vm577, 0.0, %v573
      %v579 = vsel %vm323, %v554, -inf
      %v580 = vsel %vm324, %v555, -inf
      %v581 = vsel %vm306, %v579, -inf
      %v582 = vsel %vm306, %v580, -inf
      %v583 = vmax.f32 %v581, %v582
      %v584 = vrot.slane %v583, 4
      %v585 = vmax.f32 %v583, %v584
      %v586 = vrot.slane %v585, 2
      %v587 = vmax.f32 %v585, %v586
      %v588 = vrot.slane %v587, 1
      %v589 = vmax.f32 %v587, %v588
      %p590 = por %p547, %p257
      %s591 = scalar_select %p590, 1, 0
      %v592 = vstv %s591
      %vm593 = vcmp.eq.s32.totalorder %v592, 1
      %v594 = vsel %vm593, 0.0, %v589
      %v595 = vsel %vm343, %v554, -inf
      %v596 = vsel %vm344, %v555, -inf
      %v597 = vsel %vm306, %v595, -inf
      %v598 = vsel %vm306, %v596, -inf
      %v599 = vmax.f32 %v597, %v598
      %v600 = vrot.slane %v599, 4
      %v601 = vmax.f32 %v599, %v600
      %v602 = vrot.slane %v601, 2
      %v603 = vmax.f32 %v601, %v602
      %v604 = vrot.slane %v603, 1
      %v605 = vmax.f32 %v603, %v604
      %p606 = por %p547, %p269
      %s607 = scalar_select %p606, 1, 0
      %v608 = vstv %s607
      %vm609 = vcmp.eq.s32.totalorder %v608, 1
      %v610 = vsel %vm609, 0.0, %v605
      %v611 = vsel %vm363, %v554, -inf
      %v612 = vsel %vm364, %v555, -inf
      %v613 = vsel %vm306, %v611, -inf
      %v614 = vsel %vm306, %v612, -inf
      %v615 = vmax.f32 %v613, %v614
      %v616 = vrot.slane %v615, 4
      %v617 = vmax.f32 %v615, %v616
      %v618 = vrot.slane %v617, 2
      %v619 = vmax.f32 %v617, %v618
      %v620 = vrot.slane %v619, 1
      %v621 = vmax.f32 %v619, %v620
      %p622 = por %p547, %p281
      %s623 = scalar_select %p622, 1, 0
      %v624 = vstv %s623
      %vm625 = vcmp.eq.s32.totalorder %v624, 1
      %v626 = vsel %vm625, 0.0, %v621
      %vm627 = vcmask 1040384
      %v628 = vsel %vm627, %v320, %v340
      %vm629 = vcmask 1041408
      %v630 = vsel %vm629, %v628, %v360
      %vm631 = vcmask 1042432
      %v632 = vsel %vm631, %v630, %v380
      %vm633 = vcmask 1043456
      %v634 = vsel %vm633, %v632, %v414
      %vm635 = vcmask 1044480
      %v636 = vsel %vm635, %v634, %v430
      %vm637 = vcmask 1045504
      %v638 = vsel %vm637, %v636, %v446
      %vm639 = vcmask 1046528
      %v640 = vsel %vm639, %v638, %v462
      %v641 = vsel %vm627, %v496, %v512
      %v642 = vsel %vm629, %v641, %v528
      %v643 = vsel %vm631, %v642, %v544
      %v644 = vsel %vm633, %v643, %v578
      %v645 = vsel %vm635, %v644, %v594
      %v646 = vsel %vm637, %v645, %v610
      %v647 = vsel %vm639, %v646, %v626
      %648 = vst.msk [vmem:[%s222] sm:$0xff] %vm306, %v640
      %649 = vst.msk [vmem:[%s222 + $0x8] sm:$0xff] %vm306, %v647
      %s650 = smul.u32 %s57, 6
      %s651 = sadd.s32 %s650, %s58
      %p652 = scmp.lt.s32.totalorder %s651, 5
      %s653 = scalar_select %p652, %s651, 5
      %p654 = scmp.lt.s32.totalorder %s56, 0
      %s655 = scalar_select %p654, %s56, 0
      %s656 = smul.addr %s653, 2
      %s657 = sadd.s32 %s655, %s656
      %s658 = smul.addr %s657, 8
      %s659 = scalar_lea.vmem %s7, %s658
      // Predicated region
      $region53: #{tpu_custom_call.1} parent=23 // pred_check
        %p660 = pneg %p128
      $region54: #{tpu_custom_call.1} parent=23 // pred_check_branch
        %662 = sbr.rel (%p660) target = $region56
      $region55: #{tpu_custom_call.1} parent=23 // pred_region
        %s663 = smul.u32 %s57, 6
        %s664 = sadd.s32 %s663, %s58
      $region56: #{tpu_custom_call.1} parent=23 // pred_fallthru
        _
    $region24: #{tpu_custom_call.1} parent=5 // pred_fallthru
      _
    %p665 = scmp.le.s32.totalorder 2, %s46
    // Predicated region
    $region57: #{tpu_custom_call.1} parent=5 // pred_check
      %p666 = pneg %p665
    $region58: #{tpu_custom_call.1} parent=5 // pred_check_branch
      %668 = sbr.rel (%p666) target = $region60
    $region59: #{tpu_custom_call.1} parent=5 // pred_region
      %s669 = ssub.s32 %s46, 2
      // Predicated region
      $region61: #{tpu_custom_call.1} parent=59 // pred_check
        %p670 = pneg %p134
      $region62: #{tpu_custom_call.1} parent=59 // pred_check_branch
        %672 = sbr.rel (%p670) target = $region64
      $region63: #{tpu_custom_call.1} parent=59 // pred_region
        %s673 = smul.u32 %s60, 6
        %s674 = sadd.s32 %s673, %s61
        %p675 = scmp.lt.s32.totalorder %s674, 5
        %s676 = scalar_select %p675, %s674, 5
        %p677 = scmp.lt.s32.totalorder %s59, 0
        %s678 = scalar_select %p677, %s59, 0
        %s679 = smul.addr %s676, 2
        %s680 = sadd.s32 %s678, %s679
        %s681 = smul.addr %s680, 8
        %s682 = scalar_lea.vmem %s7, %s681
      $region64: #{tpu_custom_call.1} parent=59 // pred_fallthru
        _
    $region60: #{tpu_custom_call.1} parent=5 // pred_fallthru
      _
  $region6: #{tpu_custom_call.1} parent=0 // loop_footer
    %s50 = sadd.s32 1, %s46
  $region7: #{tpu_custom_call.1} parent=0 // loop_footer_branch
    %45 = sbr.rel target = $region3
  $region8: #{tpu_custom_call.1} parent=0 // loop_exit
    _

</llo_original>
